<compile_context>
chip_gen: v7x
topology: tpu7x:2x2x1
jax: 0.10.0
libtpu: 0.0.40
codegen_flags: <defaults>
</compile_context>

<pallas_src>
import functools

import jax
import jax.numpy as jnp
import numpy as np
from jax import lax
from jax.experimental import pallas as pl
from jax.experimental.pallas import tpu as pltpu


def _round_up(x, m):
    return ((x + m - 1) // m) * m


def _pick_batch_block(B, cap=8):
    """Largest divisor of B that is <= cap and still leaves >= 2 grid steps
    (keeps both v7x TensorCores busy through the 'parallel' grid axis)."""
    limit = min(cap, max(1, B // 2))
    bt = 1
    for d in range(2, limit + 1):
        if B % d == 0:
            bt = d
    return bt


# ----------------------------------------------------------------------------
# Kernel 1: fused encoder stub + mapping contraction
#   ctx = tanh(emb @ W + b)          (Bt*S, H) -- stays in VMEM, never hits HBM
#   out = mapping @ ctx              (Bt, RQ, H), RQ = 1 (query row) + R (+pad)
# ----------------------------------------------------------------------------
def _fused_encode_map_kernel(emb_ref, w_ref, b_ref, map_ref, o_ref):
    bt, S, H = emb_ref.shape
    # Flatten the batch block: one big (Bt*S, H) @ (H, H) MXU matmul instead of Bt
    # half-filled ones (amortizes MXU push/drain + per-step overhead).
    x = emb_ref[...].reshape(bt * S, H)                                   # bf16
    acc = jnp.dot(x, w_ref[...], preferred_element_type=jnp.float32) + b_ref[...]
    # bf16 tanh: v6e/v7x have a bf16 EUP -> ~2x less transcendental time and half the
    # VMEM/vst traffic of the (Bt*S, H) intermediate (Mosaic upcasts internally on v5e).
    ctx = jnp.tanh(acc.astype(jnp.bfloat16)).reshape(bt, S, H)            # bf16
    # Batched mapping contraction (query row 0 + h_mapping rows), f32 accumulation.
    o_ref[...] = jnp.einsum("brs,bsh->brh", map_ref[...], ctx,
                            preferred_element_type=jnp.float32)


def fused_encode_map(emb, w, b, mapping, batch_block=None):
    """emb (B,S,H) bf16, w (H,H) bf16, b (1,H) f32, mapping (B,RQ,S) bf16 -> (B,RQ,H) f32."""
    B, S, H = emb.shape
    RQ = mapping.shape[1]
    bt = _pick_batch_block(B) if batch_block is None else batch_block
    return pl.pallas_call(
        _fused_encode_map_kernel,
        out_shape=jax.ShapeDtypeStruct((B, RQ, H), jnp.float32),
        grid=(B // bt,),
        in_specs=[
            pl.BlockSpec((bt, S, H), lambda i: (i, 0, 0)),
            # W/b use constant index_maps so they stay logically resident across the grid.
            # TODO(synk): for very large H on v7x (64 MiB VMEM), single-buffer W with
            #             pipeline_mode=pl.Buffered(1) to avoid the 2x H^2 footprint.
            pl.BlockSpec((H, H), lambda i: (0, 0)),
            pl.BlockSpec((1, H), lambda i: (0, 0)),
            pl.BlockSpec((bt, RQ, S), lambda i: (i, 0, 0)),
        ],
        out_specs=pl.BlockSpec((bt, RQ, H), lambda i: (i, 0, 0)),
        compiler_params=pltpu.CompilerParams(dimension_semantics=("parallel",)),
    )(emb, w, b, mapping)


# ----------------------------------------------------------------------------
# Kernel 2: NTXentLoss_wiki, single pass over the P (candidate) axis.
# Per tile k: normalize the s tile once, compute the similarity tile once, cache it
# (plus the positive mask) in VMEM scratch, and update the per-row online negative
# max / sum-exp. At the last tile, walk the cached tiles to accumulate
#   loss(i,p) = lse({pos itself} U {negatives of row i}) - mat[i,p]
# which matches the torch pair-list computation exactly; finally divide by #positives.
# ----------------------------------------------------------------------------
def _ntxent_wiki_kernel(q_ref, s_ref, posm_ref, negm_ref, o_ref,
                        qn_sc, mat_sc, posm_sc, negmax_sc, negsum_sc,
                        *, inv_temperature, num_tiles):
    k = pl.program_id(0)

    @pl.when(k == 0)
    def _init():
        negmax_sc[...] = jnp.full_like(negmax_sc, -1e30)
        negsum_sc[...] = jnp.zeros_like(negsum_sc)
        # hoisted q normalization: one rsqrt, reused for every candidate tile
        q = q_ref[...]
        qn = q * lax.rsqrt(jnp.maximum(jnp.sum(q * q, axis=1, keepdims=True), 1e-24))
        qn_sc[...] = qn.astype(jnp.bfloat16)

    # normalize this candidate tile in f32, feed the MXU in bf16, accumulate in f32
    s = s_ref[...].astype(jnp.float32)                                    # (TP, H)
    sn = s * lax.rsqrt(jnp.maximum(jnp.sum(s * s, axis=1, keepdims=True), 1e-24))
    mat = lax.dot_general(qn_sc[...], sn.astype(jnp.bfloat16),
                          (((1,), (1,)), ((), ())),
                          preferred_element_type=jnp.float32) * inv_temperature  # (B, TP)
    posm = posm_ref[...]
    negm = negm_ref[...]

    # cache the similarity + positive-mask tiles: s is read/normalized exactly once
    mat_sc[k] = mat
    posm_sc[k] = posm.astype(jnp.bfloat16)

    # online accumulation of per-row negative max / sum-exp (finite sentinel)
    neg_vals = jnp.where(negm > 0, mat, -1e30)
    tile_max = jnp.max(neg_vals, axis=1, keepdims=True)                   # (B, 1)
    new_max = jnp.maximum(negmax_sc[...], tile_max)
    scale = jnp.exp(negmax_sc[...] - new_max)
    tile_sum = jnp.sum(jnp.where(negm > 0, jnp.exp(mat - new_max), 0.0),
                       axis=1, keepdims=True)
    negsum_sc[...] = negsum_sc[...] * scale + tile_sum
    negmax_sc[...] = new_max

    @pl.when(k == num_tiles - 1)
    def _finalize():
        neg_max = negmax_sc[...]                                          # (B, 1)
        neg_sum = negsum_sc[...]                                          # (B, 1)

        def body(t, carry):
            loss_acc, cnt_acc = carry
            m = mat_sc[t]                                                 # (B, TP) f32
            pm = posm_sc[t].astype(jnp.float32)
            max_val = jnp.maximum(m, neg_max)
            lse = max_val + jnp.log(jnp.exp(m - max_val)
                                    + neg_sum * jnp.exp(neg_max - max_val))
            loss_acc = loss_acc + jnp.sum(jnp.where(pm > 0, lse - m, 0.0),
                                          axis=1, keepdims=True)
            cnt_acc = cnt_acc + jnp.sum(pm, axis=1, keepdims=True)
            return loss_acc, cnt_acc

        zeros = jnp.zeros(negmax_sc.shape, jnp.float32)
        loss_rows, cnt_rows = lax.fori_loop(0, num_tiles, body, (zeros, zeros))
        total_loss = jnp.sum(loss_rows, axis=0, keepdims=True)            # (1, 1)
        total_cnt = jnp.sum(cnt_rows, axis=0, keepdims=True)              # (1, 1)
        # guard against zero positives in this shard
        o_ref[...] = total_loss / jnp.maximum(total_cnt, 1.0)


def ntxent_wiki_loss(q, s, pos_mask, neg_mask, temperature, tile_p=512):
    """q (B,H), s (P,H), masks (B,P) {0,1} -> scalar f32 loss."""
    B, H = q.shape
    P = s.shape[0]

    # pad B to a multiple of 8 (sublane-dense VPU tiles); pad rows carry zero masks.
    # TODO(synk): for very large B on v7x, add a leading 'parallel' grid axis over
    #             B-row blocks with per-block partial (loss, count) outputs.
    B_pad = _round_up(B, 8)
    if B_pad != B:
        q = jnp.pad(q, ((0, B_pad - B), (0, 0)))
        pos_mask = jnp.pad(pos_mask, ((0, B_pad - B), (0, 0)))
        neg_mask = jnp.pad(neg_mask, ((0, 0 if False else B_pad - B), (0, 0)))

    # lane-dense candidate tiles; large tiles amortize the ~0.35 us per-grid-step cost
    TP = min(tile_p, _round_up(P, 128))
    P_pad = _round_up(P, TP)
    if P_pad != P:
        pad = P_pad - P
        s = jnp.pad(s, ((0, pad), (0, 0)))
        pos_mask = jnp.pad(pos_mask, ((0, 0), (0, pad)))
        neg_mask = jnp.pad(neg_mask, ((0, 0), (0, pad)))
    n_tiles = P_pad // TP

    kernel = functools.partial(_ntxent_wiki_kernel,
                               inv_temperature=float(1.0 / temperature),
                               num_tiles=n_tiles)
    out = pl.pallas_call(
        kernel,
        out_shape=jax.ShapeDtypeStruct((1, 1), jnp.float32),
        grid=(n_tiles,),
        in_specs=[
            pl.BlockSpec((B_pad, H), lambda k: (0, 0)),
            pl.BlockSpec((TP, H), lambda k: (k, 0)),
            pl.BlockSpec((B_pad, TP), lambda k: (0, k)),
            pl.BlockSpec((B_pad, TP), lambda k: (0, k)),
        ],
        out_specs=pl.BlockSpec((1, 1), lambda k: (0, 0)),
        scratch_shapes=[
            pltpu.VMEM((B_pad, H), jnp.bfloat16),            # hoisted qn
            # cached similarity / positive-mask slabs (B_pad*P_pad*(4+2) bytes);
            # for huge P on v7x (64 MiB VMEM) cap tile_p/P_pad or fall back to 2 passes.
            pltpu.VMEM((n_tiles, B_pad, TP), jnp.float32),
            pltpu.VMEM((n_tiles, B_pad, TP), jnp.bfloat16),
            pltpu.VMEM((B_pad, 1), jnp.float32),             # running negative max / row
            pltpu.VMEM((B_pad, 1), jnp.float32),             # running negative sum-exp / row
        ],
        compiler_params=pltpu.CompilerParams(
            dimension_semantics=("arbitrary",)),
    )(q.astype(jnp.float32),
      s.astype(jnp.bfloat16),          # bf16 HBM stream: halves the dominant traffic
      pos_mask.astype(jnp.float32),
      neg_mask.astype(jnp.float32))
    return out[0, 0]


# ----------------------------------------------------------------------------
# CP_R.forward (wiki_loss == 1 path)
# ----------------------------------------------------------------------------
def cp_r_wiki_embeddings(params, context_idxs, h_mapping, query_mapping,
                         relation_label_idx):
    B, S = context_idxs.shape
    R = h_mapping.shape[1]

    # token embedding gather (glue; stands in for the BERT encoder input)
    emb = params["embedding"][context_idxs].astype(jnp.bfloat16)          # (B, S, H)

    # Fuse query_mapping as row 0 so one batched contraction produces both
    # query_re_output and start_re_output; pad rows to a multiple of 8 (sublane-dense).
    # Built directly in bf16 via concatenate (no f32 scatter round trip).
    RQ = _round_up(R + 1, 8)
    mapping = jnp.concatenate(
        [query_mapping[:, None, :].astype(jnp.bfloat16),
         h_mapping.astype(jnp.bfloat16),
         jnp.zeros((B, RQ - (R + 1), S), jnp.bfloat16)],
        axis=1)                                                            # (B, RQ, S)

    out = fused_encode_map(emb,
                           params["w"].astype(jnp.bfloat16),
                           params["b"].astype(jnp.float32),
                           mapping)                                        # (B, RQ, H) f32

    query_re_output = out[:, 0, :]                                         # (B, H)
    # TODO(synk): fold this small row gather into the NTXent kernel via scalar-prefetched
    #             indices (PrefetchScalarGridSpec + pl.Element) to avoid the HBM round trip;
    #             P is small so it remains plain-JAX glue here.
    pair_start = out[relation_label_idx[:, 0], 1 + relation_label_idx[:, 1]]  # (P, H)
    return query_re_output, pair_start


def cp_r_wiki_forward(params, context_idxs, h_mapping, query_mapping,
                      relation_label_idx, rel_mask_pos, rel_mask_neg, temperature):
    q, s = cp_r_wiki_embeddings(params, context_idxs, h_mapping, query_mapping,
                                relation_label_idx)
    r_loss = ntxent_wiki_loss(q, s, rel_mask_pos, rel_mask_neg, temperature)
    m_loss = jnp.float32(0.0)  # TODO(synk): masked-LM loss of the pretrained BERT not translated
    return m_loss, r_loss


# ----------------------------------------------------------------------------
# References (float64 numpy): encoder/mapping pipeline and the exact torch
# pair-list NTXent computation.
# ----------------------------------------------------------------------------
def _reference_embeddings(params, context_idxs, h_mapping, query_mapping,
                          relation_label_idx):
    emb = np.asarray(params["embedding"], np.float64)[np.asarray(context_idxs)]
    w = np.asarray(params["w"], np.float64)
    b = np.asarray(params["b"], np.float64)
    ctx = np.tanh(emb @ w + b)
    q = np.einsum("bs,bsh->bh", np.asarray(query_mapping, np.float64), ctx)
    start = np.einsum("brs,bsh->brh", np.asarray(h_mapping, np.float64), ctx)
    idx = np.asarray(relation_label_idx)
    s = start[idx[:, 0], idx[:, 1]]
    return q, s


def _reference_pairlist_loss(q, s, rel_mask_pos, rel_mask_neg, temperature):
    q = np.asarray(q, np.float64)
    s = np.asarray(s, np.float64)
    qn = q / np.maximum(np.linalg.norm(q, axis=1, keepdims=True), 1e-12)
    sn = s / np.maximum(np.linalg.norm(s, axis=1, keepdims=True), 1e-12)
    mat = qn @ sn.T
    a1, p = np.nonzero(np.asarray(rel_mask_pos))
    a2, n = np.nonzero(np.asarray(rel_mask_neg))
    pos_pairs = (mat[a1, p] / temperature)[:, None]
    neg_pairs = (mat[a2, n] / temperature)[None, :]
    n_per_p = (a2[None, :] == a1[:, None]).astype(np.float64)
    neg_pairs = np.where(n_per_p > 0, neg_pairs * n_per_p, -np.inf)
    max_val = np.maximum(pos_pairs, np.max(neg_pairs, axis=1, keepdims=True))
    numerator = np.exp(pos_pairs - max_val)[:, 0]
    denominator = np.sum(np.exp(neg_pairs - max_val), axis=1) + numerator
    log_exp = np.log(numerator / denominator + 1e-20)
    return float(np.mean(-log_exp))


if __name__ == "__main__":
    # lane/sublane-dense small shapes: H=S=128 (lane dim), R+1=8 mapping rows, P=8 pairs
    B, S, H, R, V, P = 2, 128, 128, 7, 64, 8
    temperature = 0.05

    key = jax.random.PRNGKey(0)
    k_emb, k_w, k_b, k_h, k_q = jax.random.split(key, 5)

    params = {
        "embedding": jax.random.normal(k_emb, (V, H), jnp.float32) * 0.1,
        "w": jax.random.normal(k_w, (H, H), jnp.float32) * 0.1,
        "b": jax.random.normal(k_b, (1, H), jnp.float32) * 0.01,
    }

    context_idxs = (jnp.arange(B * S, dtype=jnp.int32).reshape(B, S) * 7 + 3) % V
    h_mapping = jax.random.normal(k_h, (B, R, S), jnp.float32)
    query_mapping = jax.random.normal(k_q, (B, S), jnp.float32)
    relation_label_idx = jnp.stack(
        [jnp.repeat(jnp.arange(B, dtype=jnp.int32), P // B),
         jnp.tile(jnp.arange(P // B, dtype=jnp.int32), B)], axis=1)        # (P, 2)
    rel_mask_pos = jnp.array([[1, 0, 0, 1, 0, 0, 0, 0],
                              [0, 0, 0, 0, 1, 0, 0, 1]], jnp.float32)      # (B, P)
    rel_mask_neg = jnp.array([[0, 1, 1, 0, 1, 0, 1, 0],
                              [1, 0, 0, 1, 0, 1, 0, 0]], jnp.float32)      # (B, P)

    # run fused Pallas pipeline + loss kernel
    q_k, s_k = cp_r_wiki_embeddings(params, context_idxs, h_mapping, query_mapping,
                                    relation_label_idx)
    m_loss, r_loss = cp_r_wiki_forward(params, context_idxs, h_mapping, query_mapping,
                                       relation_label_idx, rel_mask_pos, rel_mask_neg,
                                       temperature)
    r_loss = jax.block_until_ready(r_loss)
    q_np = np.asarray(q_k, np.float32)
    s_np = np.asarray(s_k, np.float32)

    # check 1: fused bf16 encoder+mapping kernel vs float64 reference (bf16 tolerance)
    q_ref, s_ref = _reference_embeddings(params, context_idxs, h_mapping, query_mapping,
                                         relation_label_idx)
    rel_q = np.linalg.norm(q_np - q_ref) / max(np.linalg.norm(q_ref), 1e-6)
    rel_s = np.linalg.norm(s_np - s_ref) / max(np.linalg.norm(s_ref), 1e-6)
    assert rel_q < 3e-2 and rel_s < 3e-2, (rel_q, rel_s)

    # check 2: NTXent kernel vs exact torch pair-list formula on the same embeddings.
    # bf16 candidate stream + bf16 MXU operands introduce ~1e-3 cosine error which
    # temperature=0.05 amplifies ~20x in the logits, hence the wider loss tolerance.
    loss_ref = _reference_pairlist_loss(q_np, s_np, rel_mask_pos, rel_mask_neg, temperature)
    assert np.isfinite(float(r_loss)), "kernel produced non-finite loss"
    assert abs(float(r_loss) - loss_ref) <= 3e-2 + 2e-2 * abs(loss_ref), (float(r_loss), loss_ref)

    print("KERNEL_OK")
</pallas_src>

<mosaic_0001>
module attributes {stable_mosaic.version = 11 : i64} {
  func.func @_fused_encode_map_kernel(%arg0: i32, %arg1: memref<1x128x128xbf16, #tpu.memory_space<vmem>>, %arg2: memref<128x128xbf16, #tpu.memory_space<vmem>>, %arg3: memref<1x128xf32, #tpu.memory_space<vmem>>, %arg4: memref<1x8x128xbf16, #tpu.memory_space<vmem>>, %arg5: memref<1x8x128xf32, #tpu.memory_space<vmem>>) attributes {dimension_semantics = [#tpu.dimension_semantics<parallel>], iteration_bounds = array<i64: 2>, scalar_prefetch = 0 : i64, scratch_operands = 0 : i64, tpu.core_type = #tpu.core_type<tc>, window_params = [{transform_indices = @transform_0, window_bounds = array<i64: 1, 128, 128>}, {pipeline_mode = #tpu.pipeline_mode<synchronous>, transform_indices = @transform_1, window_bounds = array<i64: 128, 128>}, {pipeline_mode = #tpu.pipeline_mode<synchronous>, transform_indices = @transform_2, window_bounds = array<i64: 1, 128>}, {transform_indices = @transform_3, window_bounds = array<i64: 1, 8, 128>}, {transform_indices = @transform_4, window_bounds = array<i64: 1, 8, 128>}]} {
    %c0 = arith.constant 0 : index
    %c0_0 = arith.constant 0 : index
    %c0_1 = arith.constant 0 : index
    %0 = vector.load %arg1[%c0, %c0_0, %c0_1] : memref<1x128x128xbf16, #tpu.memory_space<vmem>>, vector<1x128x128xbf16>
    %1 = vector.shape_cast %0 : vector<1x128x128xbf16> to vector<128x128xbf16>
    %c0_2 = arith.constant 0 : index
    %c0_3 = arith.constant 0 : index
    %2 = vector.load %arg2[%c0_2, %c0_3] : memref<128x128xbf16, #tpu.memory_space<vmem>>, vector<128x128xbf16>
    %cst = arith.constant dense<0.000000e+00> : vector<128x128xf32>
    %3 = tpu.matmul %1, %2, %cst {dimension_numbers = #tpu.dot_dimension_numbers<[1], [0], [0], [1], [0, 0, 1, 1], [], []>} : vector<128x128xbf16>, vector<128x128xbf16>, vector<128x128xf32> -> vector<128x128xf32>
    %c0_4 = arith.constant 0 : index
    %c0_5 = arith.constant 0 : index
    %4 = vector.load %arg3[%c0_4, %c0_5] : memref<1x128xf32, #tpu.memory_space<vmem>>, vector<1x128xf32>
    %5 = vector.broadcast %4 : vector<1x128xf32> to vector<128x128xf32>
    %6 = arith.addf %3, %5 : vector<128x128xf32>
    %7 = arith.truncf %6 : vector<128x128xf32> to vector<128x128xbf16>
    %8 = math.tanh %7 : vector<128x128xbf16>
    %9 = vector.shape_cast %8 : vector<128x128xbf16> to vector<1x128x128xbf16>
    %c0_6 = arith.constant 0 : index
    %c0_7 = arith.constant 0 : index
    %c0_8 = arith.constant 0 : index
    %10 = vector.load %arg4[%c0_6, %c0_7, %c0_8] : memref<1x8x128xbf16, #tpu.memory_space<vmem>>, vector<1x8x128xbf16>
    "tpu.trace_start"() <{level = 10 : i32, message = "brs,bsh->brh"}> : () -> ()
    %cst_9 = arith.constant dense<0.000000e+00> : vector<1x8x128xf32>
    %11 = tpu.matmul %10, %9, %cst_9 {dimension_numbers = #tpu.dot_dimension_numbers<[2], [1], [1], [2], [0, 0, 0, 1, 1, 2], [0], [0]>} : vector<1x8x128xbf16>, vector<1x128x128xbf16>, vector<1x8x128xf32> -> vector<1x8x128xf32>
    "tpu.trace_stop"() : () -> ()
    %c0_10 = arith.constant 0 : index
    %c0_11 = arith.constant 0 : index
    %c0_12 = arith.constant 0 : index
    %12 = vector.load %arg5[%c0_10, %c0_11, %c0_12] : memref<1x8x128xf32, #tpu.memory_space<vmem>>, vector<1x8x128xf32>
    tpu.vector_store %arg5[%c0_10, %c0_11, %c0_12], %11 {strides = array<i32>} : memref<1x8x128xf32, #tpu.memory_space<vmem>>, vector<1x8x128xf32>,
    return
  }
  func.func @transform_0(%arg0: i32) -> (i32, i32, i32) {
    %c0_i32 = arith.constant 0 : i32
    %c0_i32_0 = arith.constant 0 : i32
    %c0_i32_1 = arith.constant 0 : i32
    return %arg0, %c0_i32, %c0_i32_0 : i32, i32, i32
  }
  func.func @transform_1(%arg0: i32) -> (i32, i32) {
    %c0_i32 = arith.constant 0 : i32
    %c0_i32_0 = arith.constant 0 : i32
    %c0_i32_1 = arith.constant 0 : i32
    return %c0_i32, %c0_i32_0 : i32, i32
  }
  func.func @transform_2(%arg0: i32) -> (i32, i32) {
    %c0_i32 = arith.constant 0 : i32
    %c0_i32_0 = arith.constant 0 : i32
    %c0_i32_1 = arith.constant 0 : i32
    return %c0_i32, %c0_i32_0 : i32, i32
  }
  func.func @transform_3(%arg0: i32) -> (i32, i32, i32) {
    %c0_i32 = arith.constant 0 : i32
    %c0_i32_0 = arith.constant 0 : i32
    %c0_i32_1 = arith.constant 0 : i32
    return %arg0, %c0_i32, %c0_i32_0 : i32, i32, i32
  }
  func.func @transform_4(%arg0: i32) -> (i32, i32, i32) {
    %c0_i32 = arith.constant 0 : i32
    %c0_i32_0 = arith.constant 0 : i32
    %c0_i32_1 = arith.constant 0 : i32
    return %arg0, %c0_i32, %c0_i32_0 : i32, i32, i32
  }
}

</mosaic_0001>

<llo_original>
// kernel: tpu_custom_call.1
$region0: #{tpu_custom_call.1}
  #allocation0 [shape = 'u32[]', space=smem, size = 0x4, offset = 0x4, fixed_abs, tag = 'smem constant byte address 0x4 - core index']
  #allocation1 [shape = 'u32[144,128]{1,0:T(1,128)}', space=vmem, size = 0x12000, scoped, tag = 'internal scratch']
  %s0 = inlined_call_operand.hbm [shape: bf16[2,128,128], index: 0, kind: input, shape index: {}]
  %s1 = inlined_call_operand.hbm [shape: bf16[128,128], index: 1, kind: input, shape index: {}]
  %s2 = inlined_call_operand.vmem [shape: f32[1,128], index: 2, kind: input, shape index: {}]
  %s3 = inlined_call_operand.vmem [shape: bf16[2,8,128], index: 3, kind: input, shape index: {}]
  %s4 = inlined_call_operand.hbm [shape: f32[2,8,128], index: 4, kind: output, shape index: {}]
  %s5 = sld [smem:[#allocation0]]
  $region57: #{tpu_custom_call.1} parent=0
    _
  %s7 = ssub.s32 1, %s5
  %s8 = scalar_select 0, %s7, %s5
  $region1: #{tpu_custom_call.1} parent=0
    #allocation2 [shape = 'u8[65536]{0}', space=vmem, size = 0x10000, scoped, tag = 'input window, operand 0']
    #allocation3 [shape = 's32[2]{0}', space=sflag, size = 0x8, scoped, tag = 'scoped memory for tpu_custom_call.1']
    #allocation4 [shape = 's32[2]{0}', space=sflag, size = 0x8, scoped, tag = 'scoped memory for tpu_custom_call.1']
    #allocation5 [shape = 'u8[32768]{0}', space=vmem, size = 0x8000, scoped, tag = 'input window, operand 1, single buffered']
    #allocation6 [shape = 's32[1]{0}', space=sflag, size = 0x4, scoped, tag = 'scoped memory for tpu_custom_call.1']
    #allocation7 [shape = 'u8[8192]{0}', space=vmem, size = 0x2000, scoped, tag = 'output window, operand 0']
    %9 = vsyncpa [#allocation3], 0
    %s10 = scalar_lea.sflag [#allocation3], 1
    %11 = vsyncpa %s10, 0
    %12 = vsyncpa [#allocation6], 0
    %13 = vsyncpa [#allocation4], 0
    %s14 = scalar_lea.sflag [#allocation4], 1
    %15 = vsyncpa %s14, 0
    loop: start=0, step=1, limit=4
    $region2: #{tpu_custom_call.1} parent=1 // loop_pre_header
      _
    $region3: #{tpu_custom_call.1} parent=1 // loop_header
      %s17 = sphi 0, %s21
      %p18 = scmp.ge.s32.totalorder %s17, 4
      %s27 = sphi 0, %s29
      %s30 = sphi 0, %s27
      %s31 = sphi 0, %s30
      %s47 = sphi 0, %s31
      %s51 = sphi 0, %s51
      %s53 = sphi 0, %s51
      %s54 = sphi 0, %s53
      %s68 = sphi 0, %s54
      %s72 = sphi 0, %s72
      %s74 = sphi 0, %s72
      %s75 = sphi 0, %s74
      %s89 = sphi 0, %s75
      %s95 = sphi 0, %s97
      %s98 = sphi 0, %s95
      %s99 = sphi 0, %s98
      %s115 = sphi 0, %s99
      %s121 = sphi 0, %s123
      %s124 = sphi 0, %s121
      %s125 = sphi 0, %s124
      %s141 = sphi 0, %s125
    $region4: #{tpu_custom_call.1} parent=1 // loop_header_branch
      %20 = sbr.rel (%p18) target = $region8
    $region5: #{tpu_custom_call.1} parent=1 // loop_body
      %s22 = ssub.s32 %s17, 1
      %s23 = ssub.s32 %s17, 2
      %s24 = sadd.s32 %s17, 1
      %s25 = ssub.s32 %s17, %s24
      %p26 = scmp.eq.s32.totalorder %s25, 0
      %s28 = sadd.s32 %s27, 1
      %s29 = scalar_select %p26, %s27, %s28
      %p32 = pneg %p26
      %p33 = scmp.eq.s32.totalorder %s17, 1
      %p34 = por %p32, %p33
      %p35 = scmp.ne.s32.totalorder %s27, %s30
      %p36 = scmp.eq.s32.totalorder %s17, 0
      %p37 = por %p35, %p36
      %p38 = scmp.ne.s32.totalorder %s27, %s30
      %p39 = scmp.eq.s32.totalorder %s22, 1
      %p40 = por %p38, %p39
      %p41 = scmp.ne.s32.totalorder %s30, %s31
      %p42 = scmp.eq.s32.totalorder %s22, 0
      %p43 = por %p41, %p42
      %p44 = scmp.ne.s32.totalorder %s30, %s31
      %p45 = scmp.eq.s32.totalorder %s23, 1
      %p46 = por %p44, %p45
      %p48 = scmp.ne.s32.totalorder %s31, %s47
      %p49 = scmp.eq.s32.totalorder %s23, 0
      %p50 = por %p48, %p49
      %s52 = sadd.s32 %s51, 1
      %p55 = scmp.eq.s32.totalorder %s17, 1
      %p56 = scmp.ne.s32.totalorder %s51, %s53
      %p57 = scmp.eq.s32.totalorder %s17, 0
      %p58 = por %p56, %p57
      %p59 = scmp.ne.s32.totalorder %s51, %s53
      %p60 = scmp.eq.s32.totalorder %s22, 1
      %p61 = por %p59, %p60
      %p62 = scmp.ne.s32.totalorder %s53, %s54
      %p63 = scmp.eq.s32.totalorder %s22, 0
      %p64 = por %p62, %p63
      %p65 = scmp.ne.s32.totalorder %s53, %s54
      %p66 = scmp.eq.s32.totalorder %s23, 1
      %p67 = por %p65, %p66
      %p69 = scmp.ne.s32.totalorder %s54, %s68
      %p70 = scmp.eq.s32.totalorder %s23, 0
      %p71 = por %p69, %p70
      %s73 = sadd.s32 %s72, 1
      %p76 = scmp.eq.s32.totalorder %s17, 1
      %p77 = scmp.ne.s32.totalorder %s72, %s74
      %p78 = scmp.eq.s32.totalorder %s17, 0
      %p79 = por %p77, %p78
      %p80 = scmp.ne.s32.totalorder %s72, %s74
      %p81 = scmp.eq.s32.totalorder %s22, 1
      %p82 = por %p80, %p81
      %p83 = scmp.ne.s32.totalorder %s74, %s75
      %p84 = scmp.eq.s32.totalorder %s22, 0
      %p85 = por %p83, %p84
      %p86 = scmp.ne.s32.totalorder %s74, %s75
      %p87 = scmp.eq.s32.totalorder %s23, 1
      %p88 = por %p86, %p87
      %p90 = scmp.ne.s32.totalorder %s75, %s89
      %p91 = scmp.eq.s32.totalorder %s23, 0
      %p92 = por %p90, %p91
      %s93 = ssub.s32 %s17, %s24
      %p94 = scmp.eq.s32.totalorder %s93, 0
      %s96 = sadd.s32 %s95, 1
      %s97 = scalar_select %p94, %s95, %s96
      %p100 = pneg %p94
      %p101 = scmp.eq.s32.totalorder %s17, 1
      %p102 = por %p100, %p101
      %p103 = scmp.ne.s32.totalorder %s95, %s98
      %p104 = scmp.eq.s32.totalorder %s17, 0
      %p105 = por %p103, %p104
      %p106 = scmp.ne.s32.totalorder %s95, %s98
      %p107 = scmp.eq.s32.totalorder %s22, 1
      %p108 = por %p106, %p107
      %p109 = scmp.ne.s32.totalorder %s98, %s99
      %p110 = scmp.eq.s32.totalorder %s22, 0
      %p111 = por %p109, %p110
      %p112 = scmp.ne.s32.totalorder %s98, %s99
      %p113 = scmp.eq.s32.totalorder %s23, 1
      %p114 = por %p112, %p113
      %p116 = scmp.ne.s32.totalorder %s99, %s115
      %p117 = scmp.eq.s32.totalorder %s23, 0
      %p118 = por %p116, %p117
      %s119 = ssub.s32 %s17, %s24
      %p120 = scmp.eq.s32.totalorder %s119, 0
      %s122 = sadd.s32 %s121, 1
      %s123 = scalar_select %p120, %s121, %s122
      %p126 = pneg %p120
      %p127 = scmp.eq.s32.totalorder %s17, 1
      %p128 = por %p126, %p127
      %p129 = scmp.ne.s32.totalorder %s121, %s124
      %p130 = scmp.eq.s32.totalorder %s17, 0
      %p131 = por %p129, %p130
      %p132 = scmp.ne.s32.totalorder %s121, %s124
      %p133 = scmp.eq.s32.totalorder %s22, 1
      %p134 = por %p132, %p133
      %p135 = scmp.ne.s32.totalorder %s124, %s125
      %p136 = scmp.eq.s32.totalorder %s22, 0
      %p137 = por %p135, %p136
      %p138 = scmp.ne.s32.totalorder %s124, %s125
      %p139 = scmp.eq.s32.totalorder %s23, 1
      %p140 = por %p138, %p139
      %p142 = scmp.ne.s32.totalorder %s125, %s141
      %p143 = scmp.eq.s32.totalorder %s23, 0
      %p144 = por %p142, %p143
      %p145 = scmp.le.s32.totalorder 1, %s17
      %p146 = scmp.lt.s32.totalorder %s17, 3
      %p147 = pnand %p145, %p146
      %p148 = pneg %p147
      // Predicated region
      $region9: #{tpu_custom_call.1} parent=5 // pred_check
        _
      $region10: #{tpu_custom_call.1} parent=5 // pred_check_branch
        %150 = sbr.rel (%p147) target = $region12
      $region11: #{tpu_custom_call.1} parent=5 // pred_region
        %s151 = ssub.s32 %s17, 1
        // Predicated region
        $region13: #{tpu_custom_call.1} parent=11 // pred_check
          %p152 = pneg %p64
        $region14: #{tpu_custom_call.1} parent=11 // pred_check_branch
          %154 = sbr.rel (%p152) target = $region16
        $region15: #{tpu_custom_call.1} parent=11 // pred_region
          %s156 = ssub.s32 1024, 1024
          %157 = vsyncadd [#allocation6], %s156
          %s158 = sshll.u32 [#allocation5], 4
          %s159 = int_to_ptr.vmem [resolvable:$true] %s158
          %164 = dma.hbm_to_vmem [thread:$0]  %s1, 1024, %s159, [#allocation6], 64, 64, 4
        $region16: #{tpu_custom_call.1} parent=11 // pred_fallthru
          _
        // Predicated region
        $region17: #{tpu_custom_call.1} parent=11 // pred_check
          %p165 = pneg %p85
        $region18: #{tpu_custom_call.1} parent=11 // pred_check_branch
          %167 = sbr.rel (%p165) target = $region20
        $region19: #{tpu_custom_call.1} parent=11 // pred_region
          _
        $region20: #{tpu_custom_call.1} parent=11 // pred_fallthru
          _
      $region12: #{tpu_custom_call.1} parent=5 // pred_fallthru
        _
      %p168 = scmp.lt.s32.totalorder %s17, 2
      // Predicated region
      $region21: #{tpu_custom_call.1} parent=5 // pred_check
        %p169 = pneg %p168
      $region22: #{tpu_custom_call.1} parent=5 // pred_check_branch
        %171 = sbr.rel (%p169) target = $region24
      $region23: #{tpu_custom_call.1} parent=5 // pred_region
        // Predicated region
        $region25: #{tpu_custom_call.1} parent=23 // pred_check
          %p172 = pneg %p37
        $region26: #{tpu_custom_call.1} parent=23 // pred_check_branch
          %174 = sbr.rel (%p172) target = $region28
        $region27: #{tpu_custom_call.1} parent=23 // pred_region
          %s175 = sand.u32 %s27, 1
          %s176 = scalar_lea.sflag [#allocation3], %s175
          %s177 = sand.u32 %s27, 1
          %s178 = smul.addr %s177, 64
          %s179 = scalar_lea.vmem [#allocation2], %s178
          %s181 = ssub.s32 1024, 1024
          %182 = vsyncadd %s176, %s181
          %s183 = smul.addr %s17, 16
          %s184 = smul.addr %s183, 64
          %s185 = scalar_lea.hbm %s0, %s184
          %s186 = sshll.u32 %s179, 4
          %s187 = int_to_ptr.vmem [resolvable:$true] %s186
          %192 = dma.hbm_to_vmem [thread:$0]  %s185, 1024, %s187, %s176, 64, 64, 4
        $region28: #{tpu_custom_call.1} parent=23 // pred_fallthru
          _
        // Predicated region
        $region29: #{tpu_custom_call.1} parent=23 // pred_check
          %p193 = pneg %p105
        $region30: #{tpu_custom_call.1} parent=23 // pred_check_branch
          %195 = sbr.rel (%p193) target = $region32
        $region31: #{tpu_custom_call.1} parent=23 // pred_region
          %p196 = scmp.lt.s32.totalorder %s17, 1
          %s197 = scalar_select %p196, %s17, 1
          %s198 = smul.addr %s197, 4
          %s199 = scalar_lea.vmem %s3, %s198
        $region32: #{tpu_custom_call.1} parent=23 // pred_fallthru
          _
      $region24: #{tpu_custom_call.1} parent=5 // pred_fallthru
        _
      %p200 = scmp.le.s32.totalorder 1, %s17
      %p201 = scmp.lt.s32.totalorder %s17, 3
      %p202 = pnand %p200, %p201
      %p203 = pneg %p202
      // Predicated region
      $region33: #{tpu_custom_call.1} parent=5 // pred_check
        _
      $region34: #{tpu_custom_call.1} parent=5 // pred_check_branch
        %205 = sbr.rel (%p202) target = $region36
      $region35: #{tpu_custom_call.1} parent=5 // pred_region
        %s206 = ssub.s32 %s17, 1
        %s207 = sand.u32 %s30, 1
        %s208 = scalar_lea.sflag [#allocation3], %s207
        %s209 = sand.u32 %s30, 1
        %s210 = smul.addr %s209, 64
        %s211 = scalar_lea.vmem [#allocation2], %s210
        // Predicated region
        $region37: #{tpu_custom_call.1} parent=35 // pred_check
          %p212 = pneg %p43
        $region38: #{tpu_custom_call.1} parent=35 // pred_check_branch
          %214 = sbr.rel (%p212) target = $region40
        $region39: #{tpu_custom_call.1} parent=35 // pred_region
          %215 = dma.done %s208, 1024
        $region40: #{tpu_custom_call.1} parent=35 // pred_fallthru
          _
        // Predicated region
        $region41: #{tpu_custom_call.1} parent=35 // pred_check
          %p216 = pneg %p64
        $region42: #{tpu_custom_call.1} parent=35 // pred_check_branch
          %218 = sbr.rel (%p216) target = $region44
        $region43: #{tpu_custom_call.1} parent=35 // pred_region
          %219 = dma.done [#allocation6], 1024
        $region44: #{tpu_custom_call.1} parent=35 // pred_fallthru
          _
        %s220 = sand.u32 %s30, 1
        %s221 = scalar_lea.sflag [#allocation3], %s220
        %s222 = sand.u32 %s30, 1
        %s223 = smul.addr %s222, 64
        %s224 = scalar_lea.vmem [#allocation2], %s223
        %p225 = pneg %p43
        %p226 = pneg %p40
        %p227 = pneg %p64
        %p228 = pneg %p61
        %p229 = pneg %p85
        %p230 = pneg %p82
        %p231 = scmp.lt.s32.totalorder %s22, 1
        %s232 = scalar_select %p231, %s22, 1
        %s233 = smul.addr %s232, 4
        %s234 = scalar_lea.vmem %s3, %s233
        %p235 = pneg %p111
        %p236 = pneg %p108
        %p237 = pneg %p137
        %p238 = pneg %p134
        %s239 = sand.u32 %s124, 1
        %s240 = scalar_lea.sflag [#allocation4], %s239
        %s241 = sand.u32 %s124, 1
        %s242 = smul.addr %s241, 8
        %s243 = scalar_lea.vmem [#allocation7], %s242
        %p244 = scmp.lt.s32.totalorder %s22, 1
        %s245 = scalar_select %p244, %s22, 1
        %s246 = smul.addr %s245, 4
        %s247 = scalar_lea.vmem %s3, %s246
        %v249 = vld [vmem:[%s211] sm:$0xf]
        %v250 = vld [vmem:[%s211 + $0x4] sm:$0xf]
        %v251 = vld [vmem:[%s211 + $0x8] sm:$0xf]
        %v252 = vld [vmem:[%s211 + $0xc] sm:$0xf]
        %v253 = vld [vmem:[%s211 + $0x10] sm:$0xf]
        %v254 = vld [vmem:[%s211 + $0x14] sm:$0xf]
        %v255 = vld [vmem:[%s211 + $0x18] sm:$0xf]
        %v256 = vld [vmem:[%s211 + $0x1c] sm:$0xf]
        %v257 = vld [vmem:[%s211 + $0x20] sm:$0xf]
        %v258 = vld [vmem:[%s211 + $0x24] sm:$0xf]
        %v259 = vld [vmem:[%s211 + $0x28] sm:$0xf]
        %v260 = vld [vmem:[%s211 + $0x2c] sm:$0xf]
        %v261 = vld [vmem:[%s211 + $0x30] sm:$0xf]
        %v262 = vld [vmem:[%s211 + $0x34] sm:$0xf]
        %v263 = vld [vmem:[%s211 + $0x38] sm:$0xf]
        %v264 = vld [vmem:[%s211 + $0x3c] sm:$0xf]
        %v265 = vld [vmem:[#allocation5] sm:$0xf]
        %v266 = vld [vmem:[#allocation5 + $0x4] sm:$0xf]
        %v267 = vld [vmem:[#allocation5 + $0x8] sm:$0xf]
        %v268 = vld [vmem:[#allocation5 + $0xc] sm:$0xf]
        %v269 = vld [vmem:[#allocation5 + $0x10] sm:$0xf]
        %v270 = vld [vmem:[#allocation5 + $0x14] sm:$0xf]
        %v271 = vld [vmem:[#allocation5 + $0x18] sm:$0xf]
        %v272 = vld [vmem:[#allocation5 + $0x1c] sm:$0xf]
        %v273 = vld [vmem:[#allocation5 + $0x20] sm:$0xf]
        %v274 = vld [vmem:[#allocation5 + $0x24] sm:$0xf]
        %v275 = vld [vmem:[#allocation5 + $0x28] sm:$0xf]
        %v276 = vld [vmem:[#allocation5 + $0x2c] sm:$0xf]
        %v277 = vld [vmem:[#allocation5 + $0x30] sm:$0xf]
        %v278 = vld [vmem:[#allocation5 + $0x34] sm:$0xf]
        %v279 = vld [vmem:[#allocation5 + $0x38] sm:$0xf]
        %v280 = vld [vmem:[#allocation5 + $0x3c] sm:$0xf]
        %v281 = vld [vmem:[%s2] sm:$0x1]
        %v283 = vlaneseq
        %v284 = vshrl.u32 %v283, 7
        %v285 = vsub.s32 0, %v284
        %v286 = vrot.slane %v281, %v285
        %v304 = vunpack.c.l.b16 %v249
        %v305 = vunpack.c.l.b16 %v250
        %v306 = vunpack.c.l.b16 %v251
        %v307 = vunpack.c.l.b16 %v252
        %v308 = vunpack.c.l.b16 %v253
        %v309 = vunpack.c.l.b16 %v254
        %v310 = vunpack.c.l.b16 %v255
        %v311 = vunpack.c.l.b16 %v256
        %v312 = vunpack.c.l.b16 %v257
        %v313 = vunpack.c.l.b16 %v258
        %v314 = vunpack.c.l.b16 %v259
        %v315 = vunpack.c.l.b16 %v260
        %v316 = vunpack.c.l.b16 %v261
        %v317 = vunpack.c.l.b16 %v262
        %v318 = vunpack.c.l.b16 %v263
        %v319 = vunpack.c.l.b16 %v264
        %v320 = vpack.c.b16 %v305, %v304
        %v321 = vpack.c.b16 %v307, %v306
        %v322 = vpack.c.b16 %v309, %v308
        %v323 = vpack.c.b16 %v311, %v310
        %v324 = vpack.c.b16 %v313, %v312
        %v325 = vpack.c.b16 %v315, %v314
        %v326 = vpack.c.b16 %v317, %v316
        %v327 = vpack.c.b16 %v319, %v318
        %v352 = vunpack.c.l.b16 %v265
        %v353 = vunpack.c.l.b16 %v266
        %v354 = vunpack.c.l.b16 %v267
        %v355 = vunpack.c.l.b16 %v268
        %v356 = vunpack.c.l.b16 %v269
        %v357 = vunpack.c.l.b16 %v270
        %v358 = vunpack.c.l.b16 %v271
        %v359 = vunpack.c.l.b16 %v272
        %v360 = vunpack.c.l.b16 %v273
        %v361 = vunpack.c.l.b16 %v274
        %v362 = vunpack.c.l.b16 %v275
        %v363 = vunpack.c.l.b16 %v276
        %v364 = vunpack.c.l.b16 %v277
        %v365 = vunpack.c.l.b16 %v278
        %v366 = vunpack.c.l.b16 %v279
        %v367 = vunpack.c.l.b16 %v280
        %v368 = vpack.c.b16 %v353, %v352
        %v369 = vpack.c.b16 %v355, %v354
        %v370 = vpack.c.b16 %v357, %v356
        %v371 = vpack.c.b16 %v359, %v358
        %v372 = vpack.c.b16 %v361, %v360
        %v373 = vpack.c.b16 %v363, %v362
        %v374 = vpack.c.b16 %v365, %v364
        %v375 = vpack.c.b16 %v367, %v366
        %384 = vmatprep.subr.bf16.mxu0 0
        %385 = vmatpush1.bf16.msra.mxu0 %v368
        %386 = vmatprep.subr.bf16.mxu0 0
        %387 = vmatpush1.bf16.msra.mxu0 %v369
        %388 = vmatprep.subr.bf16.mxu0 0
        %389 = vmatpush1.bf16.msra.mxu0 %v370
        %390 = vmatprep.subr.bf16.mxu0 0
        %391 = vmatpush1.bf16.msra.mxu0 %v371
        %392 = vmatprep.subr.bf16.mxu0 0
        %393 = vmatpush1.bf16.msra.mxu0 %v372
        %394 = vmatprep.subr.bf16.mxu0 0
        %395 = vmatpush1.bf16.msra.mxu0 %v373
        %396 = vmatprep.subr.bf16.mxu0 0
        %397 = vmatpush1.bf16.msra.mxu0 %v374
        %398 = vmatprep.subr.bf16.mxu0 0
        %399 = vmatpush1.bf16.msra.mxu0 %v375
        %400 = vmatprep.subr.bf16.mxu0 0
        %401 = vmatpush1.bf16.msra.mxu0 0
        %402 = vmatprep.subr.bf16.mxu0 0
        %403 = vmatpush1.bf16.msra.mxu0 0
        %404 = vmatprep.subr.bf16.mxu0 0
        %405 = vmatpush1.bf16.msra.mxu0 0
        %406 = vmatprep.subr.bf16.mxu0 0
        %407 = vmatpush1.bf16.msra.mxu0 0
        %408 = vmatprep.subr.bf16.mxu0 0
        %409 = vmatpush1.bf16.msra.mxu0 0
        %410 = vmatprep.subr.bf16.mxu0 0
        %411 = vmatpush1.bf16.msra.mxu0 0
        %412 = vmatprep.subr.bf16.mxu0 0
        %413 = vmatpush1.bf16.msra.mxu0 0
        %414 = vmatprep.subr.bf16.mxu0 0
        %415 = vmatpush1.bf16.msra.mxu0 0
        %416 = vmatprep.mubr.bf16.mxu0 0
        %417 = vmatmul.mubr.bf16.gmra.mrb[0].mxu0 %v320
        %v418 = vpop.f32.mrb[0].mxu0
        %v419 = vadd.f32 %v286, %v418
        %v420 = vpop.f32.mrb[0].mxu0
        %v421 = vpop.f32.mrb[0].mxu0
        %v422 = vadd.f32 %v286, %v421
        %v423 = vpop.f32.mrb[0].mxu0
        %424 = vmatprep.mubr.bf16.mxu0 0
        %425 = vmatmul.mubr.bf16.gmra.mrb[0].mxu0 %v321
        %v426 = vpop.f32.mrb[0].mxu0
        %v427 = vadd.f32 %v286, %v426
        %v428 = vpop.f32.mrb[0].mxu0
        %v429 = vpop.f32.mrb[0].mxu0
        %v430 = vadd.f32 %v286, %v429
        %v431 = vpop.f32.mrb[0].mxu0
        %432 = vmatprep.mubr.bf16.mxu0 0
        %433 = vmatmul.mubr.bf16.gmra.mrb[0].mxu0 %v322
        %v434 = vpop.f32.mrb[0].mxu0
        %v435 = vadd.f32 %v286, %v434
        %v436 = vpop.f32.mrb[0].mxu0
        %v437 = vpop.f32.mrb[0].mxu0
        %v438 = vadd.f32 %v286, %v437
        %v439 = vpop.f32.mrb[0].mxu0
        %440 = vmatprep.mubr.bf16.mxu0 0
        %441 = vmatmul.mubr.bf16.gmra.mrb[0].mxu0 %v323
        %v442 = vpop.f32.mrb[0].mxu0
        %v443 = vadd.f32 %v286, %v442
        %v444 = vpop.f32.mrb[0].mxu0
        %v445 = vpop.f32.mrb[0].mxu0
        %v446 = vadd.f32 %v286, %v445
        %v447 = vpop.f32.mrb[0].mxu0
        %448 = vmatprep.mubr.bf16.mxu0 0
        %449 = vmatmul.mubr.bf16.gmra.mrb[0].mxu0 %v324
        %v450 = vpop.f32.mrb[0].mxu0
        %v451 = vadd.f32 %v286, %v450
        %v452 = vpop.f32.mrb[0].mxu0
        %v453 = vpop.f32.mrb[0].mxu0
        %v454 = vadd.f32 %v286, %v453
        %v455 = vpop.f32.mrb[0].mxu0
        %456 = vmatprep.mubr.bf16.mxu0 0
        %457 = vmatmul.mubr.bf16.gmra.mrb[0].mxu0 %v325
        %v458 = vpop.f32.mrb[0].mxu0
        %v459 = vadd.f32 %v286, %v458
        %v460 = vpop.f32.mrb[0].mxu0
        %v461 = vpop.f32.mrb[0].mxu0
        %v462 = vadd.f32 %v286, %v461
        %v463 = vpop.f32.mrb[0].mxu0
        %464 = vmatprep.mubr.bf16.mxu0 0
        %465 = vmatmul.mubr.bf16.gmra.mrb[0].mxu0 %v326
        %v466 = vpop.f32.mrb[0].mxu0
        %v467 = vadd.f32 %v286, %v466
        %v468 = vpop.f32.mrb[0].mxu0
        %v469 = vpop.f32.mrb[0].mxu0
        %v470 = vadd.f32 %v286, %v469
        %v471 = vpop.f32.mrb[0].mxu0
        %472 = vmatprep.mubr.bf16.mxu0 0
        %473 = vmatmul.mubr.bf16.gmra.mrb[0].mxu0 %v327
        %v474 = vpop.f32.mrb[0].mxu0
        %v475 = vadd.f32 %v286, %v474
        %v476 = vpop.f32.mrb[0].mxu0
        %v477 = vpop.f32.mrb[0].mxu0
        %v478 = vadd.f32 %v286, %v477
        %v479 = vpop.f32.mrb[0].mxu0
        %480 = vdwg.mxu0
        %v481 = vpack.c.bf16 %v422, %v419
        %v482 = vpack.c.bf16 %v430, %v427
        %v483 = vpack.c.bf16 %v438, %v435
        %v484 = vpack.c.bf16 %v446, %v443
        %v485 = vpack.c.bf16 %v454, %v451
        %v486 = vpack.c.bf16 %v462, %v459
        %v487 = vpack.c.bf16 %v470, %v467
        %v488 = vpack.c.bf16 %v478, %v475
        %v489 = vtanh.bf16.pop %v481
        %v490 = vtanh.bf16.pop %v482
        %v491 = vtanh.bf16.pop %v483
        %v492 = vtanh.bf16.pop %v484
        %v493 = vtanh.bf16.pop %v485
        %v494 = vtanh.bf16.pop %v486
        %v495 = vtanh.bf16.pop %v487
        %v496 = vtanh.bf16.pop %v488
        %v497 = vld [vmem:[%s247] sm:$0xf]
        %498 = vmatprep.subr.bf16.mxu0 0
        %499 = vmatpush1.bf16.msra.mxu0 %v489
        %500 = vmatprep.subr.bf16.mxu0 0
        %501 = vmatpush1.bf16.msra.mxu0 %v490
        %502 = vmatprep.subr.bf16.mxu0 0
        %503 = vmatpush1.bf16.msra.mxu0 %v491
        %504 = vmatprep.subr.bf16.mxu0 0
        %505 = vmatpush1.bf16.msra.mxu0 %v492
        %506 = vmatprep.subr.bf16.mxu0 0
        %507 = vmatpush1.bf16.msra.mxu0 %v493
        %508 = vmatprep.subr.bf16.mxu0 0
        %509 = vmatpush1.bf16.msra.mxu0 %v494
        %510 = vmatprep.subr.bf16.mxu0 0
        %511 = vmatpush1.bf16.msra.mxu0 %v495
        %512 = vmatprep.subr.bf16.mxu0 0
        %513 = vmatpush1.bf16.msra.mxu0 %v496
        %514 = vmatprep.subr.bf16.mxu0 0
        %515 = vmatpush1.bf16.msra.mxu0 0
        %516 = vmatprep.subr.bf16.mxu0 0
        %517 = vmatpush1.bf16.msra.mxu0 0
        %518 = vmatprep.subr.bf16.mxu0 0
        %519 = vmatpush1.bf16.msra.mxu0 0
        %520 = vmatprep.subr.bf16.mxu0 0
        %521 = vmatpush1.bf16.msra.mxu0 0
        %522 = vmatprep.subr.bf16.mxu0 0
        %523 = vmatpush1.bf16.msra.mxu0 0
        %524 = vmatprep.subr.bf16.mxu0 0
        %525 = vmatpush1.bf16.msra.mxu0 0
        %526 = vmatprep.subr.bf16.mxu0 0
        %527 = vmatpush1.bf16.msra.mxu0 0
        %528 = vmatprep.subr.bf16.mxu0 0
        %529 = vmatpush1.bf16.msra.mxu0 0
        %530 = vmatprep.mubr.bf16.mxu0 0
        %531 = vmatmul.mubr.bf16.gmra.mrb[0].mxu0 %v497
        %v532 = vpop.f32.mrb[0].mxu0
        %v533 = vadd.f32 0.0, %v532
        %v534 = vpop.f32.mrb[0].mxu0
        %v535 = vpop.f32.mrb[0].mxu0
        %v536 = vpop.f32.mrb[0].mxu0
        %537 = vdwg.mxu0
        %538 = vst [vmem:[%s243] sm:$0xff] %v533
        %s539 = sand.u32 %s124, 1
        %s540 = scalar_lea.sflag [#allocation4], %s539
        %s541 = sand.u32 %s124, 1
        %s542 = smul.addr %s541, 8
        %s543 = scalar_lea.vmem [#allocation7], %s542
        // Predicated region
        $region45: #{tpu_custom_call.1} parent=35 // pred_check
          %p544 = pneg %p134
        $region46: #{tpu_custom_call.1} parent=35 // pred_check_branch
          %546 = sbr.rel (%p544) target = $region48
        $region47: #{tpu_custom_call.1} parent=35 // pred_region
          %s548 = ssub.s32 128, 128
          %549 = vsyncadd %s540, %s548
          %s550 = smul.addr %s22, 128
          %s551 = scalar_lea.hbm %s4, %s550
          %s553 = sshll.u32 %s543, 4
          %s554 = int_to_ptr.vmem [resolvable:$true] %s553
          %556 = dma.vmem_to_hbm [thread:$0]  %s554, 128, %s551, %s540
        $region48: #{tpu_custom_call.1} parent=35 // pred_fallthru
          _
      $region36: #{tpu_custom_call.1} parent=5 // pred_fallthru
        _
      %p557 = scmp.le.s32.totalorder 2, %s17
      // Predicated region
      $region49: #{tpu_custom_call.1} parent=5 // pred_check
        %p558 = pneg %p557
      $region50: #{tpu_custom_call.1} parent=5 // pred_check_branch
        %560 = sbr.rel (%p558) target = $region52
      $region51: #{tpu_custom_call.1} parent=5 // pred_region
        %s561 = ssub.s32 %s17, 2
        // Predicated region
        $region53: #{tpu_custom_call.1} parent=51 // pred_check
          %p562 = pneg %p140
        $region54: #{tpu_custom_call.1} parent=51 // pred_check_branch
          %564 = sbr.rel (%p562) target = $region56
        $region55: #{tpu_custom_call.1} parent=51 // pred_region
          %s565 = sand.u32 %s125, 1
          %s566 = scalar_lea.sflag [#allocation4], %s565
          %s567 = sand.u32 %s125, 1
          %s568 = smul.addr %s567, 8
          %s569 = scalar_lea.vmem [#allocation7], %s568
          %570 = dma.done %s566, 128
        $region56: #{tpu_custom_call.1} parent=51 // pred_fallthru
          _
      $region52: #{tpu_custom_call.1} parent=5 // pred_fallthru
        _
    $region6: #{tpu_custom_call.1} parent=1 // loop_footer
      %s21 = sadd.s32 1, %s17
    $region7: #{tpu_custom_call.1} parent=1 // loop_footer_branch
      %16 = sbr.rel target = $region3
    $region8: #{tpu_custom_call.1} parent=1 // loop_exit
      _
    %571 = vsyncpa [#allocation3], 1
    %s572 = scalar_lea.sflag [#allocation3], 1
    %573 = vsyncpa %s572, 1
    %574 = vsyncpa [#allocation6], 1
    %575 = vsyncpa [#allocation4], 1
    %s576 = scalar_lea.sflag [#allocation4], 1
    %577 = vsyncpa %s576, 1

</llo_original>
